<compile_context>
chip_gen: v5e
topology: v5e:2x2
jax: 0.10.0
libtpu: 0.0.40
codegen_flags: <defaults>
</compile_context>

<pallas_src>
import functools

import jax
import jax.numpy as jnp
from jax.experimental import pallas as pl
from jax.experimental.pallas import tpu as pltpu

LANE = 128      # lane width of a vreg
SUBLANE = 8     # sublane count of a vreg (f32)


def _round_up(n: int, m: int) -> int:
    return ((n + m - 1) // m) * m


# -----------------------------------------------------------------------------
# Fused MLP kernel: one grid step = one batch tile through the whole network.
# refs = (x_ref, w0_ref, b0_ref, w1_ref, b1_ref, ..., o_ref)
# -----------------------------------------------------------------------------
def _fused_mlp_kernel(*refs, n_layers: int, use_bf16: bool):
    x_ref = refs[0]
    o_ref = refs[-1]

    h = x_ref[...]                                  # (TB, K0p) f32
    for layer in range(n_layers):
        w_ref = refs[1 + 2 * layer]                 # (Kin_p, Kout_p)
        b_ref = refs[2 + 2 * layer]                 # (1, Kout_p) f32
        lhs = h.astype(jnp.bfloat16) if use_bf16 else h
        y = jnp.dot(lhs, w_ref[...], preferred_element_type=jnp.float32)
        y = y + b_ref[...]                          # f32 bias add
        if layer != n_layers - 1:
            y = jnp.maximum(y, 0.0)                 # ReLU (plain, per TVAE spec)
        h = y
    o_ref[...] = h.astype(o_ref.dtype)


# -----------------------------------------------------------------------------
# Parameter construction (mirrors torch Linear default init) + lane padding.
# -----------------------------------------------------------------------------
def init_discriminator_params(key, embedding_dim, hidden_dims):
    """Unpadded params, layer sizes mirroring the torch module:
    Linear(dim, h) + ReLU for each h in hidden_dims, then Linear(dim, 2)."""
    dims = [embedding_dim] + list(hidden_dims) + [2]
    params = []
    for din, dout in zip(dims[:-1], dims[1:]):
        key, kw, kb = jax.random.split(key, 3)
        bound = 1.0 / (float(din) ** 0.5)   # U(-1/sqrt(fan_in), 1/sqrt(fan_in))
        w = jax.random.uniform(kw, (din, dout), jnp.float32, -bound, bound)
        b = jax.random.uniform(kb, (1, dout), jnp.float32, -bound, bound)
        params.append((w, b))
    return params


def pad_params(params, use_bf16: bool = False):
    """Zero-pad every weight/bias to 128-multiples along both dims (lane-dense).
    Zero-padded rows/cols + zero-padded input columns keep kept outputs exact."""
    padded = []
    for w, b in params:
        din, dout = w.shape
        dpi, dpo = _round_up(din, LANE), _round_up(dout, LANE)
        wp = jnp.zeros((dpi, dpo), jnp.float32).at[:din, :dout].set(w)
        if use_bf16:
            wp = wp.astype(jnp.bfloat16)
        bp = jnp.zeros((1, dpo), jnp.float32).at[:, :dout].set(b)
        padded.append((wp, bp))
    return padded


# -----------------------------------------------------------------------------
# Forward pass: one fused pallas_call over batch tiles.
# -----------------------------------------------------------------------------
def discriminator_forward(params_padded, x, *, out_dim: int = 2,
                          tb: int | None = None, use_bf16: bool = False):
    B, K = x.shape
    n_layers = len(params_padded)
    K_pad = params_padded[0][0].shape[0]
    N_pad = params_padded[-1][0].shape[1]

    # Batch tile: as large as practical (review: bigger tile >> tb=8),
    # sublane-aligned; pad batch so the grid divides evenly (no OOB tail).
    if tb is None:
        tb = min(512, _round_up(B, SUBLANE))
    tb = _round_up(tb, SUBLANE)
    B_pad = _round_up(B, tb)

    x_pad = jnp.zeros((B_pad, K_pad), jnp.float32).at[:B, :K].set(x)

    in_specs = [pl.BlockSpec((tb, K_pad), lambda i: (i, 0))]     # x batch tile
    inputs = [x_pad]
    for w, b in params_padded:
        kin, kout = w.shape
        in_specs.append(pl.BlockSpec((kin, kout), lambda i: (0, 0)))  # resident W
        in_specs.append(pl.BlockSpec((1, kout), lambda i: (0, 0)))    # resident b
        inputs.append(w)
        inputs.append(b)

    out = pl.pallas_call(
        functools.partial(_fused_mlp_kernel, n_layers=n_layers, use_bf16=use_bf16),
        out_shape=jax.ShapeDtypeStruct((B_pad, N_pad), jnp.float32),
        grid_spec=pl.GridSpec(
            grid=(B_pad // tb,),
            in_specs=in_specs,
            out_specs=pl.BlockSpec((tb, N_pad), lambda i: (i, 0)),
        ),
        compiler_params=pltpu.CompilerParams(
            dimension_semantics=("parallel",),   # batch axis splits across TCs (v7x)
        ),
    )(*inputs)

    return out[:B, :out_dim]   # strip batch + lane padding -> (B, 2) logits


def discriminator_forward_ref(params, x):
    h = x
    n_layers = len(params)
    for idx, (w, b) in enumerate(params):
        h = h @ w + b
        if idx != n_layers - 1:
            h = jnp.maximum(h, 0.0)
    return h


if __name__ == "__main__":
    key = jax.random.PRNGKey(0)
    k_in, k_par = jax.random.split(key)

    batch = 32
    embedding_dim = 32
    hidden_dims = [64, 32]          # add_bn=False (default)

    x = jax.random.normal(k_in, (batch, embedding_dim), jnp.float32)
    params = init_discriminator_params(k_par, embedding_dim, hidden_dims)
    ref = discriminator_forward_ref(params, x)

    # f32 MXU path (exact match to reference).
    params_f32 = pad_params(params, use_bf16=False)
    logits = discriminator_forward(params_f32, x, use_bf16=False)
    logits = jax.block_until_ready(logits)
    assert logits.shape == (batch, 2)
    assert jnp.allclose(logits, ref, atol=1e-5, rtol=1e-5)

    # bf16 MXU path (v6e/v7x native bf16 MXU; f32 accumulate + bias/ReLU).
    params_bf16 = pad_params(params, use_bf16=True)
    logits_bf16 = jax.block_until_ready(
        discriminator_forward(params_bf16, x, use_bf16=True))
    assert logits_bf16.shape == (batch, 2)
    assert jnp.allclose(logits_bf16, ref, atol=5e-2, rtol=5e-2)

    print("KERNEL_OK")
</pallas_src>

<mosaic_0001>
module attributes {stable_mosaic.version = 11 : i64} {
  func.func @_fused_mlp_kernel(%arg0: i32, %arg1: memref<32x128xf32, #tpu.memory_space<vmem>>, %arg2: memref<128x128xf32, #tpu.memory_space<vmem>>, %arg3: memref<1x128xf32, #tpu.memory_space<vmem>>, %arg4: memref<128x128xf32, #tpu.memory_space<vmem>>, %arg5: memref<1x128xf32, #tpu.memory_space<vmem>>, %arg6: memref<128x128xf32, #tpu.memory_space<vmem>>, %arg7: memref<1x128xf32, #tpu.memory_space<vmem>>, %arg8: memref<32x128xf32, #tpu.memory_space<vmem>>) attributes {dimension_semantics = [#tpu.dimension_semantics<parallel>], iteration_bounds = array<i64: 1>, scalar_prefetch = 0 : i64, scratch_operands = 0 : i64, tpu.core_type = #tpu.core_type<tc>, window_params = [{transform_indices = @transform_0, window_bounds = array<i64: 32, 128>}, {pipeline_mode = #tpu.pipeline_mode<synchronous>, transform_indices = @transform_1, window_bounds = array<i64: 128, 128>}, {pipeline_mode = #tpu.pipeline_mode<synchronous>, transform_indices = @transform_2, window_bounds = array<i64: 1, 128>}, {pipeline_mode = #tpu.pipeline_mode<synchronous>, transform_indices = @transform_3, window_bounds = array<i64: 128, 128>}, {pipeline_mode = #tpu.pipeline_mode<synchronous>, transform_indices = @transform_4, window_bounds = array<i64: 1, 128>}, {pipeline_mode = #tpu.pipeline_mode<synchronous>, transform_indices = @transform_5, window_bounds = array<i64: 128, 128>}, {pipeline_mode = #tpu.pipeline_mode<synchronous>, transform_indices = @transform_6, window_bounds = array<i64: 1, 128>}, {transform_indices = @transform_7, window_bounds = array<i64: 32, 128>}]} {
    %c0 = arith.constant 0 : index
    %c0_0 = arith.constant 0 : index
    %0 = vector.load %arg1[%c0, %c0_0] : memref<32x128xf32, #tpu.memory_space<vmem>>, vector<32x128xf32>
    %c0_1 = arith.constant 0 : index
    %c0_2 = arith.constant 0 : index
    %1 = vector.load %arg2[%c0_1, %c0_2] : memref<128x128xf32, #tpu.memory_space<vmem>>, vector<128x128xf32>
    %cst = arith.constant dense<0.000000e+00> : vector<32x128xf32>
    %2 = tpu.matmul %0, %1, %cst {dimension_numbers = #tpu.dot_dimension_numbers<[1], [0], [0], [1], [0, 0, 1, 1], [], []>} : vector<32x128xf32>, vector<128x128xf32>, vector<32x128xf32> -> vector<32x128xf32>
    %c0_3 = arith.constant 0 : index
    %c0_4 = arith.constant 0 : index
    %3 = vector.load %arg3[%c0_3, %c0_4] : memref<1x128xf32, #tpu.memory_space<vmem>>, vector<1x128xf32>
    %4 = vector.broadcast %3 : vector<1x128xf32> to vector<32x128xf32>
    %5 = arith.addf %2, %4 : vector<32x128xf32>
    %cst_5 = arith.constant 0.000000e+00 : f32
    %6 = vector.broadcast %cst_5 : f32 to vector<32x128xf32>
    %7 = arith.maximumf %5, %6 : vector<32x128xf32>
    %c0_6 = arith.constant 0 : index
    %c0_7 = arith.constant 0 : index
    %8 = vector.load %arg4[%c0_6, %c0_7] : memref<128x128xf32, #tpu.memory_space<vmem>>, vector<128x128xf32>
    %cst_8 = arith.constant dense<0.000000e+00> : vector<32x128xf32>
    %9 = tpu.matmul %7, %8, %cst_8 {dimension_numbers = #tpu.dot_dimension_numbers<[1], [0], [0], [1], [0, 0, 1, 1], [], []>} : vector<32x128xf32>, vector<128x128xf32>, vector<32x128xf32> -> vector<32x128xf32>
    %c0_9 = arith.constant 0 : index
    %c0_10 = arith.constant 0 : index
    %10 = vector.load %arg5[%c0_9, %c0_10] : memref<1x128xf32, #tpu.memory_space<vmem>>, vector<1x128xf32>
    %11 = vector.broadcast %10 : vector<1x128xf32> to vector<32x128xf32>
    %12 = arith.addf %9, %11 : vector<32x128xf32>
    %cst_11 = arith.constant 0.000000e+00 : f32
    %13 = vector.broadcast %cst_11 : f32 to vector<32x128xf32>
    %14 = arith.maximumf %12, %13 : vector<32x128xf32>
    %c0_12 = arith.constant 0 : index
    %c0_13 = arith.constant 0 : index
    %15 = vector.load %arg6[%c0_12, %c0_13] : memref<128x128xf32, #tpu.memory_space<vmem>>, vector<128x128xf32>
    %cst_14 = arith.constant dense<0.000000e+00> : vector<32x128xf32>
    %16 = tpu.matmul %14, %15, %cst_14 {dimension_numbers = #tpu.dot_dimension_numbers<[1], [0], [0], [1], [0, 0, 1, 1], [], []>} : vector<32x128xf32>, vector<128x128xf32>, vector<32x128xf32> -> vector<32x128xf32>
    %c0_15 = arith.constant 0 : index
    %c0_16 = arith.constant 0 : index
    %17 = vector.load %arg7[%c0_15, %c0_16] : memref<1x128xf32, #tpu.memory_space<vmem>>, vector<1x128xf32>
    %18 = vector.broadcast %17 : vector<1x128xf32> to vector<32x128xf32>
    %19 = arith.addf %16, %18 : vector<32x128xf32>
    %c0_17 = arith.constant 0 : index
    %c0_18 = arith.constant 0 : index
    %20 = vector.load %arg8[%c0_17, %c0_18] : memref<32x128xf32, #tpu.memory_space<vmem>>, vector<32x128xf32>
    tpu.vector_store %arg8[%c0_17, %c0_18], %19 {strides = array<i32>} : memref<32x128xf32, #tpu.memory_space<vmem>>, vector<32x128xf32>,
    return
  }
  func.func @transform_0(%arg0: i32) -> (i32, i32) {
    %c0_i32 = arith.constant 0 : i32
    %c0_i32_0 = arith.constant 0 : i32
    return %arg0, %c0_i32 : i32, i32
  }
  func.func @transform_1(%arg0: i32) -> (i32, i32) {
    %c0_i32 = arith.constant 0 : i32
    %c0_i32_0 = arith.constant 0 : i32
    %c0_i32_1 = arith.constant 0 : i32
    return %c0_i32, %c0_i32_0 : i32, i32
  }
  func.func @transform_2(%arg0: i32) -> (i32, i32) {
    %c0_i32 = arith.constant 0 : i32
    %c0_i32_0 = arith.constant 0 : i32
    %c0_i32_1 = arith.constant 0 : i32
    return %c0_i32, %c0_i32_0 : i32, i32
  }
  func.func @transform_3(%arg0: i32) -> (i32, i32) {
    %c0_i32 = arith.constant 0 : i32
    %c0_i32_0 = arith.constant 0 : i32
    %c0_i32_1 = arith.constant 0 : i32
    return %c0_i32, %c0_i32_0 : i32, i32
  }
  func.func @transform_4(%arg0: i32) -> (i32, i32) {
    %c0_i32 = arith.constant 0 : i32
    %c0_i32_0 = arith.constant 0 : i32
    %c0_i32_1 = arith.constant 0 : i32
    return %c0_i32, %c0_i32_0 : i32, i32
  }
  func.func @transform_5(%arg0: i32) -> (i32, i32) {
    %c0_i32 = arith.constant 0 : i32
    %c0_i32_0 = arith.constant 0 : i32
    %c0_i32_1 = arith.constant 0 : i32
    return %c0_i32, %c0_i32_0 : i32, i32
  }
  func.func @transform_6(%arg0: i32) -> (i32, i32) {
    %c0_i32 = arith.constant 0 : i32
    %c0_i32_0 = arith.constant 0 : i32
    %c0_i32_1 = arith.constant 0 : i32
    return %c0_i32, %c0_i32_0 : i32, i32
  }
  func.func @transform_7(%arg0: i32) -> (i32, i32) {
    %c0_i32 = arith.constant 0 : i32
    %c0_i32_0 = arith.constant 0 : i32
    return %arg0, %c0_i32 : i32, i32
  }
}

</mosaic_0001>

<llo_original>
// kernel: tpu_custom_call.1
$region0: #{tpu_custom_call.1}
  #allocation0 [shape = 'u32[]', space=smem, size = 0x4, offset = 0x4, fixed_abs, tag = 'smem constant byte address 0x4 - core index']
  #allocation1 [shape = 'u32[72,128]{1,0:T(1,128)}', space=vmem, size = 0x9000, scoped, tag = 'internal scratch']
  %s0 = inlined_call_operand.hbm [shape: f32[32,128], index: 0, kind: input, shape index: {}]
  %s1 = inlined_call_operand.hbm [shape: f32[128,128], index: 1, kind: input, shape index: {}]
  %s2 = inlined_call_operand.vmem [shape: f32[1,128], index: 2, kind: input, shape index: {}]
  %s3 = inlined_call_operand.hbm [shape: f32[128,128], index: 3, kind: input, shape index: {}]
  %s4 = inlined_call_operand.vmem [shape: f32[1,128], index: 4, kind: input, shape index: {}]
  %s5 = inlined_call_operand.hbm [shape: f32[128,128], index: 5, kind: input, shape index: {}]
  %s6 = inlined_call_operand.vmem [shape: f32[1,128], index: 6, kind: input, shape index: {}]
  %s7 = inlined_call_operand.hbm [shape: f32[32,128], index: 7, kind: output, shape index: {}]
  %s8 = sld [smem:[#allocation0]]
  $region54: #{tpu_custom_call.1} parent=0
    _
  %s10 = ssub.s32 1, %s8
  %s11 = scalar_select 0, %s10, %s8
  $region1: #{tpu_custom_call.1} parent=0
    #allocation2 [shape = 'u8[16384]{0}', space=vmem, size = 0x4000, scoped, tag = 'input window, operand 0, single buffered']
    #allocation3 [shape = 's32[1]{0}', space=sflag, size = 0x4, scoped, tag = 'scoped memory for tpu_custom_call.1']
    #allocation4 [shape = 's32[1]{0}', space=sflag, size = 0x4, scoped, tag = 'scoped memory for tpu_custom_call.1']
    #allocation5 [shape = 'u8[65536]{0}', space=vmem, size = 0x10000, scoped, tag = 'input window, operand 1, single buffered']
    #allocation6 [shape = 's32[1]{0}', space=sflag, size = 0x4, scoped, tag = 'scoped memory for tpu_custom_call.1']
    #allocation7 [shape = 'u8[65536]{0}', space=vmem, size = 0x10000, scoped, tag = 'input window, operand 3, single buffered']
    #allocation8 [shape = 'u8[65536]{0}', space=vmem, size = 0x10000, scoped, tag = 'input window, operand 5, single buffered']
    #allocation9 [shape = 's32[1]{0}', space=sflag, size = 0x4, scoped, tag = 'scoped memory for tpu_custom_call.1']
    #allocation10 [shape = 'u8[16384]{0}', space=vmem, size = 0x4000, scoped, tag = 'output window, operand 0, single buffered']
    %12 = vsyncpa [#allocation3], 0
    %13 = vsyncpa [#allocation6], 0
    %14 = vsyncpa [#allocation9], 0
    %15 = vsyncpa [#allocation4], 0
    // Predicated region
    $region2: #{tpu_custom_call.1} parent=1 // pred_check
      _
    $region3: #{tpu_custom_call.1} parent=1 // pred_check_branch
      %17 = sbr.rel (0) target = $region5
    $region4: #{tpu_custom_call.1} parent=1 // pred_region
      %19 = vsyncadd [#allocation3], 0
      %s20 = sshll.u32 %s0, 4
      %s21 = int_to_ptr.hbm [resolvable:$true] %s20
      %s22 = sshll.u32 [#allocation2], 4
      %s23 = int_to_ptr.vmem [resolvable:$true] %s22
      %28 = dma.hbm_to_vmem [thread:$0]  %s21, 512, %s23, [#allocation3], 128, 128, 8
    $region5: #{tpu_custom_call.1} parent=1 // pred_fallthru
      _
    // Predicated region
    $region6: #{tpu_custom_call.1} parent=1 // pred_check
      _
    $region7: #{tpu_custom_call.1} parent=1 // pred_check_branch
      %30 = sbr.rel (0) target = $region9
    $region8: #{tpu_custom_call.1} parent=1 // pred_region
      %32 = vsyncadd [#allocation6], 0
      %s33 = sshll.u32 %s1, 4
      %s34 = int_to_ptr.hbm [resolvable:$true] %s33
      %s35 = sshll.u32 [#allocation5], 4
      %s36 = int_to_ptr.vmem [resolvable:$true] %s35
      %41 = dma.hbm_to_vmem [thread:$0]  %s34, 2048, %s36, [#allocation6], 128, 128, 8
    $region9: #{tpu_custom_call.1} parent=1 // pred_fallthru
      _
    // Predicated region
    $region10: #{tpu_custom_call.1} parent=1 // pred_check
      _
    $region11: #{tpu_custom_call.1} parent=1 // pred_check_branch
      %43 = sbr.rel (0) target = $region13
    $region12: #{tpu_custom_call.1} parent=1 // pred_region
      _
    $region13: #{tpu_custom_call.1} parent=1 // pred_fallthru
      _
    // Predicated region
    $region14: #{tpu_custom_call.1} parent=1 // pred_check
      _
    $region15: #{tpu_custom_call.1} parent=1 // pred_check_branch
      %45 = sbr.rel (0) target = $region17
    $region16: #{tpu_custom_call.1} parent=1 // pred_region
      %47 = vsyncadd [#allocation6], 0
      %s48 = sshll.u32 %s3, 4
      %s49 = int_to_ptr.hbm [resolvable:$true] %s48
      %s50 = sshll.u32 [#allocation7], 4
      %s51 = int_to_ptr.vmem [resolvable:$true] %s50
      %56 = dma.hbm_to_vmem [thread:$0]  %s49, 2048, %s51, [#allocation6], 128, 128, 8
    $region17: #{tpu_custom_call.1} parent=1 // pred_fallthru
      _
    // Predicated region
    $region18: #{tpu_custom_call.1} parent=1 // pred_check
      _
    $region19: #{tpu_custom_call.1} parent=1 // pred_check_branch
      %58 = sbr.rel (0) target = $region21
    $region20: #{tpu_custom_call.1} parent=1 // pred_region
      _
    $region21: #{tpu_custom_call.1} parent=1 // pred_fallthru
      _
    // Predicated region
    $region22: #{tpu_custom_call.1} parent=1 // pred_check
      _
    $region23: #{tpu_custom_call.1} parent=1 // pred_check_branch
      %60 = sbr.rel (0) target = $region25
    $region24: #{tpu_custom_call.1} parent=1 // pred_region
      %62 = vsyncadd [#allocation9], 0
      %s63 = sshll.u32 %s5, 4
      %s64 = int_to_ptr.hbm [resolvable:$true] %s63
      %s65 = sshll.u32 [#allocation8], 4
      %s66 = int_to_ptr.vmem [resolvable:$true] %s65
      %71 = dma.hbm_to_vmem [thread:$0]  %s64, 2048, %s66, [#allocation9], 128, 128, 8
    $region25: #{tpu_custom_call.1} parent=1 // pred_fallthru
      _
    // Predicated region
    $region26: #{tpu_custom_call.1} parent=1 // pred_check
      _
    $region27: #{tpu_custom_call.1} parent=1 // pred_check_branch
      %73 = sbr.rel (0) target = $region29
    $region28: #{tpu_custom_call.1} parent=1 // pred_region
      _
    $region29: #{tpu_custom_call.1} parent=1 // pred_fallthru
      _
    // Predicated region
    $region30: #{tpu_custom_call.1} parent=1 // pred_check
      _
    $region31: #{tpu_custom_call.1} parent=1 // pred_check_branch
      %75 = sbr.rel (0) target = $region33
    $region32: #{tpu_custom_call.1} parent=1 // pred_region
      %77 = dma.done [#allocation3], 512
    $region33: #{tpu_custom_call.1} parent=1 // pred_fallthru
      _
    // Predicated region
    $region34: #{tpu_custom_call.1} parent=1 // pred_check
      _
    $region35: #{tpu_custom_call.1} parent=1 // pred_check_branch
      %79 = sbr.rel (0) target = $region37
    $region36: #{tpu_custom_call.1} parent=1 // pred_region
      %81 = dma.done [#allocation6], 2048
    $region37: #{tpu_custom_call.1} parent=1 // pred_fallthru
      _
    // Predicated region
    $region38: #{tpu_custom_call.1} parent=1 // pred_check
      _
    $region39: #{tpu_custom_call.1} parent=1 // pred_check_branch
      %83 = sbr.rel (0) target = $region41
    $region40: #{tpu_custom_call.1} parent=1 // pred_region
      %85 = dma.done [#allocation6], 2048
    $region41: #{tpu_custom_call.1} parent=1 // pred_fallthru
      _
    // Predicated region
    $region42: #{tpu_custom_call.1} parent=1 // pred_check
      _
    $region43: #{tpu_custom_call.1} parent=1 // pred_check_branch
      %87 = sbr.rel (0) target = $region45
    $region44: #{tpu_custom_call.1} parent=1 // pred_region
      %89 = dma.done [#allocation9], 2048
    $region45: #{tpu_custom_call.1} parent=1 // pred_fallthru
      _
    %v90 = vld [vmem:[#allocation2] sm:$0xff]
    %v91 = vld [vmem:[#allocation2 + $0x8] sm:$0xff]
    %v92 = vld [vmem:[#allocation2 + $0x10] sm:$0xff]
    %v93 = vld [vmem:[#allocation2 + $0x18] sm:$0xff]
    %v94 = vld [vmem:[#allocation5] sm:$0xff]
    %v95 = vld [vmem:[#allocation5 + $0x8] sm:$0xff]
    %v96 = vld [vmem:[#allocation5 + $0x10] sm:$0xff]
    %v97 = vld [vmem:[#allocation5 + $0x18] sm:$0xff]
    %v98 = vld [vmem:[#allocation5 + $0x20] sm:$0xff]
    %v99 = vld [vmem:[#allocation5 + $0x28] sm:$0xff]
    %v100 = vld [vmem:[#allocation5 + $0x30] sm:$0xff]
    %v101 = vld [vmem:[#allocation5 + $0x38] sm:$0xff]
    %v102 = vld [vmem:[#allocation5 + $0x40] sm:$0xff]
    %v103 = vld [vmem:[#allocation5 + $0x48] sm:$0xff]
    %v104 = vld [vmem:[#allocation5 + $0x50] sm:$0xff]
    %v105 = vld [vmem:[#allocation5 + $0x58] sm:$0xff]
    %v106 = vld [vmem:[#allocation5 + $0x60] sm:$0xff]
    %v107 = vld [vmem:[#allocation5 + $0x68] sm:$0xff]
    %v108 = vld [vmem:[#allocation5 + $0x70] sm:$0xff]
    %v109 = vld [vmem:[#allocation5 + $0x78] sm:$0xff]
    %v110 = vld [vmem:[%s2] sm:$0x1]
    %v112 = vperm.slane %v110, 0
    %114 = vmatpush.msra.mxu0 %v109
    %115 = vmatpush.msra.mxu0 %v108
    %116 = vmatpush.msra.mxu0 %v107
    %117 = vmatpush.msra.mxu0 %v106
    %118 = vmatpush.msra.mxu0 %v105
    %119 = vmatpush.msra.mxu0 %v104
    %120 = vmatpush.msra.mxu0 %v103
    %121 = vmatpush.msra.mxu0 %v102
    %122 = vmatpush.msra.mxu0 %v101
    %123 = vmatpush.msra.mxu0 %v100
    %124 = vmatpush.msra.mxu0 %v99
    %125 = vmatpush.msra.mxu0 %v98
    %126 = vmatpush.msra.mxu0 %v97
    %127 = vmatpush.msra.mxu0 %v96
    %128 = vmatpush.msra.mxu0 %v95
    %129 = vmatpush.msra.mxu0 %v94
    %130 = vmatmul.f32.gmra.mxu0 %v90
    %v131 = vpop.f32.mrf.mxu0
    %v132 = vadd.f32 %v112, %v131
    %133 = vmatmul.f32.gmra.mxu0 %v91
    %v134 = vpop.f32.mrf.mxu0
    %v135 = vadd.f32 %v112, %v134
    %136 = vmatmul.f32.gmra.mxu0 %v92
    %v137 = vpop.f32.mrf.mxu0
    %v138 = vadd.f32 %v112, %v137
    %139 = vmatmul.f32.gmra.mxu0 %v93
    %v140 = vpop.f32.mrf.mxu0
    %v141 = vadd.f32 %v112, %v140
    %142 = vdwg.mxu0
    %v143 = vmax.f32 %v132, 0.0
    %v144 = vmax.f32 %v135, 0.0
    %v145 = vmax.f32 %v138, 0.0
    %v146 = vmax.f32 %v141, 0.0
    %v147 = vld [vmem:[#allocation7] sm:$0xff]
    %v148 = vld [vmem:[#allocation7 + $0x8] sm:$0xff]
    %v149 = vld [vmem:[#allocation7 + $0x10] sm:$0xff]
    %v150 = vld [vmem:[#allocation7 + $0x18] sm:$0xff]
    %v151 = vld [vmem:[#allocation7 + $0x20] sm:$0xff]
    %v152 = vld [vmem:[#allocation7 + $0x28] sm:$0xff]
    %v153 = vld [vmem:[#allocation7 + $0x30] sm:$0xff]
    %v154 = vld [vmem:[#allocation7 + $0x38] sm:$0xff]
    %v155 = vld [vmem:[#allocation7 + $0x40] sm:$0xff]
    %v156 = vld [vmem:[#allocation7 + $0x48] sm:$0xff]
    %v157 = vld [vmem:[#allocation7 + $0x50] sm:$0xff]
    %v158 = vld [vmem:[#allocation7 + $0x58] sm:$0xff]
    %v159 = vld [vmem:[#allocation7 + $0x60] sm:$0xff]
    %v160 = vld [vmem:[#allocation7 + $0x68] sm:$0xff]
    %v161 = vld [vmem:[#allocation7 + $0x70] sm:$0xff]
    %v162 = vld [vmem:[#allocation7 + $0x78] sm:$0xff]
    %v163 = vld [vmem:[%s4] sm:$0x1]
    %v165 = vperm.slane %v163, 0
    %167 = vmatpush.msra.mxu0 %v162
    %168 = vmatpush.msra.mxu0 %v161
    %169 = vmatpush.msra.mxu0 %v160
    %170 = vmatpush.msra.mxu0 %v159
    %171 = vmatpush.msra.mxu0 %v158
    %172 = vmatpush.msra.mxu0 %v157
    %173 = vmatpush.msra.mxu0 %v156
    %174 = vmatpush.msra.mxu0 %v155
    %175 = vmatpush.msra.mxu0 %v154
    %176 = vmatpush.msra.mxu0 %v153
    %177 = vmatpush.msra.mxu0 %v152
    %178 = vmatpush.msra.mxu0 %v151
    %179 = vmatpush.msra.mxu0 %v150
    %180 = vmatpush.msra.mxu0 %v149
    %181 = vmatpush.msra.mxu0 %v148
    %182 = vmatpush.msra.mxu0 %v147
    %183 = vmatmul.f32.gmra.mxu0 %v143
    %v184 = vpop.f32.mrf.mxu0
    %v185 = vadd.f32 %v165, %v184
    %186 = vmatmul.f32.gmra.mxu0 %v144
    %v187 = vpop.f32.mrf.mxu0
    %v188 = vadd.f32 %v165, %v187
    %189 = vmatmul.f32.gmra.mxu0 %v145
    %v190 = vpop.f32.mrf.mxu0
    %v191 = vadd.f32 %v165, %v190
    %192 = vmatmul.f32.gmra.mxu0 %v146
    %v193 = vpop.f32.mrf.mxu0
    %v194 = vadd.f32 %v165, %v193
    %195 = vdwg.mxu0
    %v196 = vmax.f32 %v185, 0.0
    %v197 = vmax.f32 %v188, 0.0
    %v198 = vmax.f32 %v191, 0.0
    %v199 = vmax.f32 %v194, 0.0
    %v200 = vld [vmem:[#allocation8] sm:$0xff]
    %v201 = vld [vmem:[#allocation8 + $0x8] sm:$0xff]
    %v202 = vld [vmem:[#allocation8 + $0x10] sm:$0xff]
    %v203 = vld [vmem:[#allocation8 + $0x18] sm:$0xff]
    %v204 = vld [vmem:[#allocation8 + $0x20] sm:$0xff]
    %v205 = vld [vmem:[#allocation8 + $0x28] sm:$0xff]
    %v206 = vld [vmem:[#allocation8 + $0x30] sm:$0xff]
    %v207 = vld [vmem:[#allocation8 + $0x38] sm:$0xff]
    %v208 = vld [vmem:[#allocation8 + $0x40] sm:$0xff]
    %v209 = vld [vmem:[#allocation8 + $0x48] sm:$0xff]
    %v210 = vld [vmem:[#allocation8 + $0x50] sm:$0xff]
    %v211 = vld [vmem:[#allocation8 + $0x58] sm:$0xff]
    %v212 = vld [vmem:[#allocation8 + $0x60] sm:$0xff]
    %v213 = vld [vmem:[#allocation8 + $0x68] sm:$0xff]
    %v214 = vld [vmem:[#allocation8 + $0x70] sm:$0xff]
    %v215 = vld [vmem:[#allocation8 + $0x78] sm:$0xff]
    %v216 = vld [vmem:[%s6] sm:$0x1]
    %v218 = vperm.slane %v216, 0
    %220 = vmatpush.msra.mxu0 %v215
    %221 = vmatpush.msra.mxu0 %v214
    %222 = vmatpush.msra.mxu0 %v213
    %223 = vmatpush.msra.mxu0 %v212
    %224 = vmatpush.msra.mxu0 %v211
    %225 = vmatpush.msra.mxu0 %v210
    %226 = vmatpush.msra.mxu0 %v209
    %227 = vmatpush.msra.mxu0 %v208
    %228 = vmatpush.msra.mxu0 %v207
    %229 = vmatpush.msra.mxu0 %v206
    %230 = vmatpush.msra.mxu0 %v205
    %231 = vmatpush.msra.mxu0 %v204
    %232 = vmatpush.msra.mxu0 %v203
    %233 = vmatpush.msra.mxu0 %v202
    %234 = vmatpush.msra.mxu0 %v201
    %235 = vmatpush.msra.mxu0 %v200
    %236 = vmatmul.f32.gmra.mxu0 %v196
    %v237 = vpop.f32.mrf.mxu0
    %v238 = vadd.f32 %v218, %v237
    %239 = vmatmul.f32.gmra.mxu0 %v197
    %v240 = vpop.f32.mrf.mxu0
    %v241 = vadd.f32 %v218, %v240
    %242 = vmatmul.f32.gmra.mxu0 %v198
    %v243 = vpop.f32.mrf.mxu0
    %v244 = vadd.f32 %v218, %v243
    %245 = vmatmul.f32.gmra.mxu0 %v199
    %v246 = vpop.f32.mrf.mxu0
    %v247 = vadd.f32 %v218, %v246
    %248 = vdwg.mxu0
    %249 = vst [vmem:[#allocation10] sm:$0xff] %v238
    %250 = vst [vmem:[#allocation10 + $0x8] sm:$0xff] %v241
    %251 = vst [vmem:[#allocation10 + $0x10] sm:$0xff] %v244
    %252 = vst [vmem:[#allocation10 + $0x18] sm:$0xff] %v247
    // Predicated region
    $region46: #{tpu_custom_call.1} parent=1 // pred_check
      _
    $region47: #{tpu_custom_call.1} parent=1 // pred_check_branch
      %254 = sbr.rel (0) target = $region49
    $region48: #{tpu_custom_call.1} parent=1 // pred_region
      %256 = vsyncadd [#allocation4], 0
      %s257 = sshll.u32 [#allocation10], 4
      %s258 = int_to_ptr.vmem [resolvable:$true] %s257
      %s259 = sshll.u32 %s7, 4
      %s260 = int_to_ptr.hbm [resolvable:$true] %s259
      %265 = dma.vmem_to_hbm [thread:$0]  %s258, 512, %s260, [#allocation4], 128, 128, 8
    $region49: #{tpu_custom_call.1} parent=1 // pred_fallthru
      _
    // Predicated region
    $region50: #{tpu_custom_call.1} parent=1 // pred_check
      _
    $region51: #{tpu_custom_call.1} parent=1 // pred_check_branch
      %267 = sbr.rel (0) target = $region53
    $region52: #{tpu_custom_call.1} parent=1 // pred_region
      %269 = dma.done [#allocation4], 512
    $region53: #{tpu_custom_call.1} parent=1 // pred_fallthru
      _
    %270 = vsyncpa [#allocation3], 1
    %271 = vsyncpa [#allocation6], 1
    %272 = vsyncpa [#allocation9], 1
    %273 = vsyncpa [#allocation4], 1

</llo_original>
